<compile_context>
chip_gen: v7x
topology: tpu7x:2x2x1
jax: 0.10.0
libtpu: 0.0.40
codegen_flags: <defaults>
</compile_context>

<pallas_src>
import functools
from typing import NamedTuple

import jax
import jax.numpy as jnp
from jax.experimental import pallas as pl
from jax.experimental.pallas import tpu as pltpu


def _round_up(x, m):
    return ((x + m - 1) // m) * m


# ----------------------------------------------------------------------------
# Fused / padded parameters: built once at model init, reused every forward.
# ----------------------------------------------------------------------------
class FusedBoxHeadParams(NamedTuple):
    w_fused: jax.Array   # [K, P]  compute dtype (bf16), per-head 128-lane aligned
    b_fused: jax.Array   # [1, P]  float32
    num_classes: int     # C
    num_bbox: int        # 4*C
    cls_width: int       # round_up(C, 128)   -- lane offset where bbox head starts
    bbox_width: int      # round_up(4C, 128)


def prepare_box_head(w_cls, b_cls, w_bbox, b_bbox, *, compute_dtype=jnp.bfloat16):
    """Fuse the two FastRCNNPredictor heads into one lane-dense weight slab.

    w_cls:  [K, C]  (pre-transposed), b_cls:  [C] or [1, C]
    w_bbox: [K, 4C] (pre-transposed), b_bbox: [4C] or [1, 4C]
    Each head is padded separately to a 128-lane boundary so the post-kernel
    slices are lane-aligned (free views of the output slab).
    """
    k, c = w_cls.shape
    c4 = w_bbox.shape[1]
    pc = _round_up(c, 128)
    pb = _round_up(c4, 128)

    w_fused = jnp.zeros((k, pc + pb), compute_dtype)
    w_fused = w_fused.at[:, :c].set(w_cls.astype(compute_dtype))
    w_fused = w_fused.at[:, pc:pc + c4].set(w_bbox.astype(compute_dtype))

    b_fused = jnp.zeros((1, pc + pb), jnp.float32)
    b_fused = b_fused.at[:, :c].set(jnp.reshape(b_cls, (1, c)).astype(jnp.float32))
    b_fused = b_fused.at[:, pc:pc + c4].set(
        jnp.reshape(b_bbox, (1, c4)).astype(jnp.float32))

    return FusedBoxHeadParams(w_fused, b_fused, c, c4, pc, pb)


# ----------------------------------------------------------------------------
# Kernel: one ROI tile against the fused lane-dense weight slab.
# ----------------------------------------------------------------------------
def _box_head_kernel(x_ref, w_ref, b_ref, out_ref):
    acc = jnp.dot(x_ref[...], w_ref[...], preferred_element_type=jnp.float32)
    out_ref[...] = (acc + b_ref[...]).astype(out_ref.dtype)


def _pick_tile(n, *, max_tile=512, min_tiles=1):
    """Tile-size policy.

    Default: N (rounded to 8) fits in one block up to 2*max_tile rows -> zero
    padding, single DMA-in/MXU/DMA-out.  Larger N uses tiles of max_tile.
    `min_tiles=2` can be used on v7x to keep both TensorCores busy on large N.
    """
    n8 = _round_up(max(n, 8), 8)
    if min_tiles <= 1 and n8 <= 2 * max_tile:
        return n8
    tm = min(max_tile, _round_up(pl.cdiv(n8, max(min_tiles, 1)), 8))
    return max(tm, 8)


def fastrcnn_predictor(roi_feats, params: FusedBoxHeadParams, *,
                       max_tile=512, min_tiles=1):
    """FastRCNNPredictor box head forward.

    roi_feats: [N, K] float32/bf16 ROI-pooled features.
    Returns (cls_scores [N, C], bbox_deltas [N, 4C]) in float32.
    """
    n, k = roi_feats.shape
    assert params.w_fused.shape[0] == k
    p = params.cls_width + params.bbox_width

    # bf16 feature slab: halves HBM->VMEM DMA bytes; f32 accumulation in-kernel.
    x = roi_feats.astype(params.w_fused.dtype)

    tm_eff = _pick_tile(n, max_tile=max_tile, min_tiles=min_tiles)
    n_pad = _round_up(n, tm_eff)
    if n_pad != n:          # only for ragged multi-tile cases; common N is 8-aligned
        x = jnp.pad(x, ((0, n_pad - n), (0, 0)))
    grid = (n_pad // tm_eff,)

    fused_out = pl.pallas_call(
        _box_head_kernel,
        out_shape=jax.ShapeDtypeStruct((n_pad, p), jnp.float32),
        grid_spec=pltpu.PrefetchScalarGridSpec(
            num_scalar_prefetch=0,
            grid=grid,
            in_specs=[
                pl.BlockSpec((tm_eff, k), lambda i: (i, 0)),  # ROI feature tile
                pl.BlockSpec((k, p), lambda i: (0, 0)),       # fused weights (resident)
                pl.BlockSpec((1, p), lambda i: (0, 0)),       # fused bias (resident)
            ],
            out_specs=pl.BlockSpec((tm_eff, p), lambda i: (i, 0)),
        ),
        compiler_params=pltpu.CompilerParams(
            dimension_semantics=("parallel",)),   # shards ROI tiles across v7x's 2 TCs
    )(x, params.w_fused, params.b_fused)

    # Both slices start on 128-lane boundaries -> no post-kernel relayout copies.
    cls_scores = fused_out[:n, :params.num_classes]
    bbox_deltas = fused_out[:n, params.cls_width:params.cls_width + params.num_bbox]
    return cls_scores, bbox_deltas


def weighted_detection_loss(losses):
    """Reproduces VehicleDetectionModel.forward(images, targets) loss weighting."""
    total = (1.0 * losses["loss_classifier"]
             + 1.0 * losses["loss_box_reg"]
             + 0.7 * losses["loss_objectness"]
             + 0.7 * losses["loss_rpn_box_reg"])
    return total, losses


# TODO(synk): the ResNet50-FPN-v2 backbone, RPN proposal generation, ROI-align
# and NMS postprocessing of torchvision's fasterrcnn_resnet50_fpn_v2 are an
# entire detection framework and are not implemented as Pallas kernels here.


if __name__ == "__main__":
    key = jax.random.PRNGKey(0)
    k0, k1, k2, k3, k4 = jax.random.split(key, 5)

    # Small, self-consistent shapes (real model: in_features=1024, ~1000 ROIs).
    num_rois = 200
    in_features = 256
    num_classes = 8          # includes background

    roi_feats = jax.random.normal(k0, (num_rois, in_features), jnp.float32)
    w_cls = 0.02 * jax.random.normal(k1, (in_features, num_classes), jnp.float32)
    b_cls = 0.01 * jax.random.normal(k2, (1, num_classes), jnp.float32)
    w_bbox = 0.02 * jax.random.normal(k3, (in_features, num_classes * 4), jnp.float32)
    b_bbox = 0.01 * jax.random.normal(k4, (1, num_classes * 4), jnp.float32)

    # Fused / padded weights built ONCE (model init), reused every forward.
    params = prepare_box_head(w_cls, b_cls, w_bbox, b_bbox)

    # jit the forward with params closed over (arrays become cached constants).
    forward = jax.jit(lambda x: fastrcnn_predictor(x, params))

    cls_scores, bbox_deltas = forward(roi_feats)
    jax.block_until_ready((cls_scores, bbox_deltas))

    # Reference check. Kernel uses bf16 inputs with f32 accumulation, so compare
    # against a bf16-matched f32 reference (tight) and the pure-f32 one (loose).
    xb = roi_feats.astype(jnp.bfloat16).astype(jnp.float32)
    wcb = w_cls.astype(jnp.bfloat16).astype(jnp.float32)
    wbb = w_bbox.astype(jnp.bfloat16).astype(jnp.float32)
    ref_cls_bf16 = xb @ wcb + b_cls
    ref_bbx_bf16 = xb @ wbb + b_bbox
    assert cls_scores.shape == (num_rois, num_classes)
    assert bbox_deltas.shape == (num_rois, num_classes * 4)
    assert jnp.allclose(cls_scores, ref_cls_bf16, atol=1e-3, rtol=1e-3)
    assert jnp.allclose(bbox_deltas, ref_bbx_bf16, atol=1e-3, rtol=1e-3)
    assert jnp.allclose(cls_scores, roi_feats @ w_cls + b_cls, atol=3e-2)
    assert jnp.allclose(bbox_deltas, roi_feats @ w_bbox + b_bbox, atol=3e-2)

    # Multi-tile / ragged case (grid > 1) to exercise the pipelined path.
    kk = jax.random.split(key, 2)[1]
    roi_feats2 = jax.random.normal(kk, (600, in_features), jnp.float32)
    cls2, bbx2 = fastrcnn_predictor(roi_feats2, params, max_tile=128)
    jax.block_until_ready((cls2, bbx2))
    xb2 = roi_feats2.astype(jnp.bfloat16).astype(jnp.float32)
    assert jnp.allclose(cls2, xb2 @ wcb + b_cls, atol=1e-3, rtol=1e-3)
    assert jnp.allclose(bbx2, xb2 @ wbb + b_bbox, atol=1e-3, rtol=1e-3)

    # v7x-style split across 2 TensorCores (min_tiles=2) on the same inputs.
    cls3, bbx3 = fastrcnn_predictor(roi_feats2, params, min_tiles=2)
    jax.block_until_ready((cls3, bbx3))
    assert jnp.allclose(cls3, xb2 @ wcb + b_cls, atol=1e-3, rtol=1e-3)
    assert jnp.allclose(bbx3, xb2 @ wbb + b_bbox, atol=1e-3, rtol=1e-3)

    # Exercise the (training-mode) weighted loss combination.
    fake_losses = {
        "loss_classifier": jnp.float32(0.5),
        "loss_box_reg": jnp.float32(0.3),
        "loss_objectness": jnp.float32(0.2),
        "loss_rpn_box_reg": jnp.float32(0.1),
    }
    total_loss, _ = weighted_detection_loss(fake_losses)
    jax.block_until_ready(total_loss)

    print("KERNEL_OK")
</pallas_src>

<mosaic_0001>
module attributes {stable_mosaic.version = 11 : i64} {
  func.func @_box_head_kernel(%arg0: i32, %arg1: memref<200x256xbf16, #tpu.memory_space<vmem>>, %arg2: memref<256x256xbf16, #tpu.memory_space<vmem>>, %arg3: memref<1x256xf32, #tpu.memory_space<vmem>>, %arg4: memref<200x256xf32, #tpu.memory_space<vmem>>) attributes {dimension_semantics = [#tpu.dimension_semantics<parallel>], iteration_bounds = array<i64: 1>, scalar_prefetch = 0 : i64, scratch_operands = 0 : i64, tpu.core_type = #tpu.core_type<tc>, window_params = [{transform_indices = @transform_0, window_bounds = array<i64: 200, 256>}, {pipeline_mode = #tpu.pipeline_mode<synchronous>, transform_indices = @transform_1, window_bounds = array<i64: 256, 256>}, {pipeline_mode = #tpu.pipeline_mode<synchronous>, transform_indices = @transform_2, window_bounds = array<i64: 1, 256>}, {transform_indices = @transform_3, window_bounds = array<i64: 200, 256>}]} {
    %c0 = arith.constant 0 : index
    %c0_0 = arith.constant 0 : index
    %0 = vector.load %arg1[%c0, %c0_0] : memref<200x256xbf16, #tpu.memory_space<vmem>>, vector<200x256xbf16>
    %c0_1 = arith.constant 0 : index
    %c0_2 = arith.constant 0 : index
    %1 = vector.load %arg2[%c0_1, %c0_2] : memref<256x256xbf16, #tpu.memory_space<vmem>>, vector<256x256xbf16>
    %cst = arith.constant dense<0.000000e+00> : vector<200x256xf32>
    %2 = tpu.matmul %0, %1, %cst {dimension_numbers = #tpu.dot_dimension_numbers<[1], [0], [0], [1], [0, 0, 1, 1], [], []>} : vector<200x256xbf16>, vector<256x256xbf16>, vector<200x256xf32> -> vector<200x256xf32>
    %c0_3 = arith.constant 0 : index
    %c0_4 = arith.constant 0 : index
    %3 = vector.load %arg3[%c0_3, %c0_4] : memref<1x256xf32, #tpu.memory_space<vmem>>, vector<1x256xf32>
    %4 = vector.broadcast %3 : vector<1x256xf32> to vector<200x256xf32>
    %5 = arith.addf %2, %4 : vector<200x256xf32>
    %c0_5 = arith.constant 0 : index
    %c0_6 = arith.constant 0 : index
    %6 = vector.load %arg4[%c0_5, %c0_6] : memref<200x256xf32, #tpu.memory_space<vmem>>, vector<200x256xf32>
    tpu.vector_store %arg4[%c0_5, %c0_6], %5 {strides = array<i32>} : memref<200x256xf32, #tpu.memory_space<vmem>>, vector<200x256xf32>,
    return
  }
  func.func @transform_0(%arg0: i32) -> (i32, i32) {
    %c0_i32 = arith.constant 0 : i32
    %c0_i32_0 = arith.constant 0 : i32
    return %arg0, %c0_i32 : i32, i32
  }
  func.func @transform_1(%arg0: i32) -> (i32, i32) {
    %c0_i32 = arith.constant 0 : i32
    %c0_i32_0 = arith.constant 0 : i32
    %c0_i32_1 = arith.constant 0 : i32
    return %c0_i32, %c0_i32_0 : i32, i32
  }
  func.func @transform_2(%arg0: i32) -> (i32, i32) {
    %c0_i32 = arith.constant 0 : i32
    %c0_i32_0 = arith.constant 0 : i32
    %c0_i32_1 = arith.constant 0 : i32
    return %c0_i32, %c0_i32_0 : i32, i32
  }
  func.func @transform_3(%arg0: i32) -> (i32, i32) {
    %c0_i32 = arith.constant 0 : i32
    %c0_i32_0 = arith.constant 0 : i32
    return %arg0, %c0_i32 : i32, i32
  }
}

</mosaic_0001>

<llo_original>
// kernel: _lambda_.1
$region0: #{_lambda_.1}
  #allocation0 [shape = 'u32[]', space=smem, size = 0x4, offset = 0x4, fixed_abs, tag = 'smem constant byte address 0x4 - core index']
  #allocation1 [shape = 'u32[144,128]{1,0:T(1,128)}', space=vmem, size = 0x12000, scoped, tag = 'internal scratch']
  %s0 = inlined_call_operand.vmem [shape: bf16[200,256], index: 0, kind: input, shape index: {}]
  %s1 = inlined_call_operand.vmem [shape: bf16[256,256], index: 1, kind: input, shape index: {}]
  %s2 = inlined_call_operand.vmem [shape: f32[1,256], index: 2, kind: input, shape index: {}]
  %s3 = inlined_call_operand.vmem [shape: f32[200,256], index: 3, kind: output, shape index: {}]
  %s4 = sld [smem:[#allocation0]]
  $region22: #{_lambda_.1} parent=0
    _
  %s6 = ssub.s32 1, %s4
  %s7 = scalar_select 0, %s6, %s4
  // Predicated region
  $region2: #{_lambda_.1} parent=0 // pred_check
    _
  $region3: #{_lambda_.1} parent=0 // pred_check_branch
    %9 = sbr.rel (0) target = $region5
  $region4: #{_lambda_.1} parent=0 // pred_region
    _
  $region5: #{_lambda_.1} parent=0 // pred_fallthru
    _
  // Predicated region
  $region6: #{_lambda_.1} parent=0 // pred_check
    _
  $region7: #{_lambda_.1} parent=0 // pred_check_branch
    %11 = sbr.rel (0) target = $region9
  $region8: #{_lambda_.1} parent=0 // pred_region
    _
  $region9: #{_lambda_.1} parent=0 // pred_fallthru
    _
  // Predicated region
  $region10: #{_lambda_.1} parent=0 // pred_check
    _
  $region11: #{_lambda_.1} parent=0 // pred_check_branch
    %13 = sbr.rel (0) target = $region13
  $region12: #{_lambda_.1} parent=0 // pred_region
    _
  $region13: #{_lambda_.1} parent=0 // pred_fallthru
    _
  %v14 = vld [vmem:[%s0] sm:$0xff]
  %v15 = vld [vmem:[%s0 + $0x8] sm:$0xff]
  %v16 = vld [vmem:[%s0 + $0x10] sm:$0xff]
  %v17 = vld [vmem:[%s0 + $0x18] sm:$0xff]
  %v18 = vld [vmem:[%s0 + $0x20] sm:$0xff]
  %v19 = vld [vmem:[%s0 + $0x28] sm:$0xff]
  %v20 = vld [vmem:[%s0 + $0x30] sm:$0xff]
  %v21 = vld [vmem:[%s0 + $0x38] sm:$0xff]
  %v22 = vld [vmem:[%s0 + $0x40] sm:$0xff]
  %v23 = vld [vmem:[%s0 + $0x48] sm:$0xff]
  %v24 = vld [vmem:[%s0 + $0x50] sm:$0xff]
  %v25 = vld [vmem:[%s0 + $0x58] sm:$0xff]
  %v26 = vld [vmem:[%s0 + $0x60] sm:$0xff]
  %v27 = vld [vmem:[%s0 + $0x68] sm:$0xff]
  %v28 = vld [vmem:[%s0 + $0x70] sm:$0xff]
  %v29 = vld [vmem:[%s0 + $0x78] sm:$0xff]
  %v30 = vld [vmem:[%s0 + $0x80] sm:$0xff]
  %v31 = vld [vmem:[%s0 + $0x88] sm:$0xff]
  %v32 = vld [vmem:[%s0 + $0x90] sm:$0xff]
  %v33 = vld [vmem:[%s0 + $0x98] sm:$0xff]
  %v34 = vld [vmem:[%s0 + $0xa0] sm:$0xff]
  %v35 = vld [vmem:[%s0 + $0xa8] sm:$0xff]
  %v36 = vld [vmem:[%s0 + $0xb0] sm:$0xff]
  %v37 = vld [vmem:[%s0 + $0xb8] sm:$0xff]
  %v38 = vld [vmem:[%s0 + $0xc0] sm:$0xff]
  %v39 = vld [vmem:[%s1] sm:$0xff]
  %v40 = vld [vmem:[%s1 + $0x8] sm:$0xff]
  %v41 = vld [vmem:[%s1 + $0x10] sm:$0xff]
  %v42 = vld [vmem:[%s1 + $0x18] sm:$0xff]
  %v43 = vld [vmem:[%s1 + $0x20] sm:$0xff]
  %v44 = vld [vmem:[%s1 + $0x28] sm:$0xff]
  %v45 = vld [vmem:[%s1 + $0x30] sm:$0xff]
  %v46 = vld [vmem:[%s1 + $0x38] sm:$0xff]
  %v47 = vld [vmem:[%s1 + $0x40] sm:$0xff]
  %v48 = vld [vmem:[%s1 + $0x48] sm:$0xff]
  %v49 = vld [vmem:[%s1 + $0x50] sm:$0xff]
  %v50 = vld [vmem:[%s1 + $0x58] sm:$0xff]
  %v51 = vld [vmem:[%s1 + $0x60] sm:$0xff]
  %v52 = vld [vmem:[%s1 + $0x68] sm:$0xff]
  %v53 = vld [vmem:[%s1 + $0x70] sm:$0xff]
  %v54 = vld [vmem:[%s1 + $0x78] sm:$0xff]
  %v55 = vld [vmem:[%s1 + $0x80] sm:$0xff]
  %v56 = vld [vmem:[%s1 + $0x88] sm:$0xff]
  %v57 = vld [vmem:[%s1 + $0x90] sm:$0xff]
  %v58 = vld [vmem:[%s1 + $0x98] sm:$0xff]
  %v59 = vld [vmem:[%s1 + $0xa0] sm:$0xff]
  %v60 = vld [vmem:[%s1 + $0xa8] sm:$0xff]
  %v61 = vld [vmem:[%s1 + $0xb0] sm:$0xff]
  %v62 = vld [vmem:[%s1 + $0xb8] sm:$0xff]
  %v63 = vld [vmem:[%s1 + $0xc0] sm:$0xff]
  %v64 = vld [vmem:[%s1 + $0xc8] sm:$0xff]
  %v65 = vld [vmem:[%s1 + $0xd0] sm:$0xff]
  %v66 = vld [vmem:[%s1 + $0xd8] sm:$0xff]
  %v67 = vld [vmem:[%s1 + $0xe0] sm:$0xff]
  %v68 = vld [vmem:[%s1 + $0xe8] sm:$0xff]
  %v69 = vld [vmem:[%s1 + $0xf0] sm:$0xff]
  %v70 = vld [vmem:[%s1 + $0xf8] sm:$0xff]
  %v71 = vld [vmem:[%s2] sm:$0x3]
  %v73 = vlaneseq
  %v74 = vshrl.u32 %v73, 7
  %v75 = vsub.s32 0, %v74
  %v76 = vrot.slane %v71, %v75
  %v77 = vlaneseq
  %v78 = vshrl.u32 %v77, 7
  %v79 = vsub.s32 1, %v78
  %v80 = vrot.slane %v71, %v79
  %v108 = vunpack.c.l.b16 %v14
  %v109 = vunpack.c.h.b16 %v14
  %v110 = vunpack.c.l.b16 %v15
  %v111 = vunpack.c.h.b16 %v15
  %v112 = vunpack.c.l.b16 %v16
  %v113 = vunpack.c.h.b16 %v16
  %v114 = vunpack.c.l.b16 %v17
  %v115 = vunpack.c.h.b16 %v17
  %v116 = vunpack.c.l.b16 %v18
  %v117 = vunpack.c.h.b16 %v18
  %v118 = vunpack.c.l.b16 %v19
  %v119 = vunpack.c.h.b16 %v19
  %v120 = vunpack.c.l.b16 %v20
  %v121 = vunpack.c.h.b16 %v20
  %v122 = vunpack.c.l.b16 %v21
  %v123 = vunpack.c.h.b16 %v21
  %v124 = vunpack.c.l.b16 %v22
  %v125 = vunpack.c.h.b16 %v22
  %v126 = vunpack.c.l.b16 %v23
  %v127 = vunpack.c.h.b16 %v23
  %v128 = vunpack.c.l.b16 %v24
  %v129 = vunpack.c.h.b16 %v24
  %v130 = vunpack.c.l.b16 %v25
  %v131 = vunpack.c.h.b16 %v25
  %v132 = vunpack.c.l.b16 %v26
  %v133 = vunpack.c.h.b16 %v26
  %v134 = vunpack.c.l.b16 %v27
  %v135 = vunpack.c.h.b16 %v27
  %v136 = vunpack.c.l.b16 %v28
  %v137 = vunpack.c.h.b16 %v28
  %v138 = vunpack.c.l.b16 %v29
  %v139 = vunpack.c.h.b16 %v29
  %v140 = vunpack.c.l.b16 %v30
  %v141 = vunpack.c.h.b16 %v30
  %v142 = vunpack.c.l.b16 %v31
  %v143 = vunpack.c.h.b16 %v31
  %v144 = vunpack.c.l.b16 %v32
  %v145 = vunpack.c.h.b16 %v32
  %v146 = vunpack.c.l.b16 %v33
  %v147 = vunpack.c.h.b16 %v33
  %v148 = vunpack.c.l.b16 %v34
  %v149 = vunpack.c.h.b16 %v34
  %v150 = vunpack.c.l.b16 %v35
  %v151 = vunpack.c.h.b16 %v35
  %v152 = vunpack.c.l.b16 %v36
  %v153 = vunpack.c.h.b16 %v36
  %v154 = vunpack.c.l.b16 %v37
  %v155 = vunpack.c.h.b16 %v37
  %v156 = vunpack.c.l.b16 %v38
  %v157 = vunpack.c.h.b16 %v38
  %v158 = vpack.c.b16 %v110, %v108
  %v159 = vpack.c.b16 %v111, %v109
  %v160 = vpack.c.b16 %v114, %v112
  %v161 = vpack.c.b16 %v115, %v113
  %v162 = vpack.c.b16 %v118, %v116
  %v163 = vpack.c.b16 %v119, %v117
  %v164 = vpack.c.b16 %v122, %v120
  %v165 = vpack.c.b16 %v123, %v121
  %v166 = vpack.c.b16 %v126, %v124
  %v167 = vpack.c.b16 %v127, %v125
  %v168 = vpack.c.b16 %v130, %v128
  %v169 = vpack.c.b16 %v131, %v129
  %v170 = vpack.c.b16 %v134, %v132
  %v171 = vpack.c.b16 %v135, %v133
  %v172 = vpack.c.b16 %v138, %v136
  %v173 = vpack.c.b16 %v139, %v137
  %v174 = vpack.c.b16 %v142, %v140
  %v175 = vpack.c.b16 %v143, %v141
  %v176 = vpack.c.b16 %v146, %v144
  %v177 = vpack.c.b16 %v147, %v145
  %v178 = vpack.c.b16 %v150, %v148
  %v179 = vpack.c.b16 %v151, %v149
  %v180 = vpack.c.b16 %v154, %v152
  %v181 = vpack.c.b16 %v155, %v153
  %v182 = vpack.c.b16 %v156, %v156
  %v183 = vpack.c.b16 %v157, %v157
  %v242 = vunpack.c.l.b16 %v39
  %v243 = vunpack.c.h.b16 %v39
  %v244 = vunpack.c.l.b16 %v40
  %v245 = vunpack.c.h.b16 %v40
  %v246 = vunpack.c.l.b16 %v41
  %v247 = vunpack.c.h.b16 %v41
  %v248 = vunpack.c.l.b16 %v42
  %v249 = vunpack.c.h.b16 %v42
  %v250 = vunpack.c.l.b16 %v43
  %v251 = vunpack.c.h.b16 %v43
  %v252 = vunpack.c.l.b16 %v44
  %v253 = vunpack.c.h.b16 %v44
  %v254 = vunpack.c.l.b16 %v45
  %v255 = vunpack.c.h.b16 %v45
  %v256 = vunpack.c.l.b16 %v46
  %v257 = vunpack.c.h.b16 %v46
  %v258 = vunpack.c.l.b16 %v47
  %v259 = vunpack.c.h.b16 %v47
  %v260 = vunpack.c.l.b16 %v48
  %v261 = vunpack.c.h.b16 %v48
  %v262 = vunpack.c.l.b16 %v49
  %v263 = vunpack.c.h.b16 %v49
  %v264 = vunpack.c.l.b16 %v50
  %v265 = vunpack.c.h.b16 %v50
  %v266 = vunpack.c.l.b16 %v51
  %v267 = vunpack.c.h.b16 %v51
  %v268 = vunpack.c.l.b16 %v52
  %v269 = vunpack.c.h.b16 %v52
  %v270 = vunpack.c.l.b16 %v53
  %v271 = vunpack.c.h.b16 %v53
  %v272 = vunpack.c.l.b16 %v54
  %v273 = vunpack.c.h.b16 %v54
  %v274 = vunpack.c.l.b16 %v55
  %v275 = vunpack.c.h.b16 %v55
  %v276 = vunpack.c.l.b16 %v56
  %v277 = vunpack.c.h.b16 %v56
  %v278 = vunpack.c.l.b16 %v57
  %v279 = vunpack.c.h.b16 %v57
  %v280 = vunpack.c.l.b16 %v58
  %v281 = vunpack.c.h.b16 %v58
  %v282 = vunpack.c.l.b16 %v59
  %v283 = vunpack.c.h.b16 %v59
  %v284 = vunpack.c.l.b16 %v60
  %v285 = vunpack.c.h.b16 %v60
  %v286 = vunpack.c.l.b16 %v61
  %v287 = vunpack.c.h.b16 %v61
  %v288 = vunpack.c.l.b16 %v62
  %v289 = vunpack.c.h.b16 %v62
  %v290 = vunpack.c.l.b16 %v63
  %v291 = vunpack.c.h.b16 %v63
  %v292 = vunpack.c.l.b16 %v64
  %v293 = vunpack.c.h.b16 %v64
  %v294 = vunpack.c.l.b16 %v65
  %v295 = vunpack.c.h.b16 %v65
  %v296 = vunpack.c.l.b16 %v66
  %v297 = vunpack.c.h.b16 %v66
  %v298 = vunpack.c.l.b16 %v67
  %v299 = vunpack.c.h.b16 %v67
  %v300 = vunpack.c.l.b16 %v68
  %v301 = vunpack.c.h.b16 %v68
  %v302 = vunpack.c.l.b16 %v69
  %v303 = vunpack.c.h.b16 %v69
  %v304 = vunpack.c.l.b16 %v70
  %v305 = vunpack.c.h.b16 %v70
  %v306 = vpack.c.b16 %v244, %v242
  %v307 = vpack.c.b16 %v245, %v243
  %v308 = vpack.c.b16 %v248, %v246
  %v309 = vpack.c.b16 %v249, %v247
  %v310 = vpack.c.b16 %v252, %v250
  %v311 = vpack.c.b16 %v253, %v251
  %v312 = vpack.c.b16 %v256, %v254
  %v313 = vpack.c.b16 %v257, %v255
  %v314 = vpack.c.b16 %v260, %v258
  %v315 = vpack.c.b16 %v261, %v259
  %v316 = vpack.c.b16 %v264, %v262
  %v317 = vpack.c.b16 %v265, %v263
  %v318 = vpack.c.b16 %v268, %v266
  %v319 = vpack.c.b16 %v269, %v267
  %v320 = vpack.c.b16 %v272, %v270
  %v321 = vpack.c.b16 %v273, %v271
  %v322 = vpack.c.b16 %v276, %v274
  %v323 = vpack.c.b16 %v277, %v275
  %v324 = vpack.c.b16 %v280, %v278
  %v325 = vpack.c.b16 %v281, %v279
  %v326 = vpack.c.b16 %v284, %v282
  %v327 = vpack.c.b16 %v285, %v283
  %v328 = vpack.c.b16 %v288, %v286
  %v329 = vpack.c.b16 %v289, %v287
  %v330 = vpack.c.b16 %v292, %v290
  %v331 = vpack.c.b16 %v293, %v291
  %v332 = vpack.c.b16 %v296, %v294
  %v333 = vpack.c.b16 %v297, %v295
  %v334 = vpack.c.b16 %v300, %v298
  %v335 = vpack.c.b16 %v301, %v299
  %v336 = vpack.c.b16 %v304, %v302
  %v337 = vpack.c.b16 %v305, %v303
  %370 = vmatprep.subr.bf16.mxu0 %v307
  %371 = vmatpush1.bf16.msra.mxu0 %v306
  %372 = vmatprep.subr.bf16.mxu0 %v309
  %373 = vmatpush1.bf16.msra.mxu0 %v308
  %374 = vmatprep.subr.bf16.mxu0 %v311
  %375 = vmatpush1.bf16.msra.mxu0 %v310
  %376 = vmatprep.subr.bf16.mxu0 %v313
  %377 = vmatpush1.bf16.msra.mxu0 %v312
  %378 = vmatprep.subr.bf16.mxu0 %v315
  %379 = vmatpush1.bf16.msra.mxu0 %v314
  %380 = vmatprep.subr.bf16.mxu0 %v317
  %381 = vmatpush1.bf16.msra.mxu0 %v316
  %382 = vmatprep.subr.bf16.mxu0 %v319
  %383 = vmatpush1.bf16.msra.mxu0 %v318
  %384 = vmatprep.subr.bf16.mxu0 %v321
  %385 = vmatpush1.bf16.msra.mxu0 %v320
  %386 = vmatprep.subr.bf16.mxu0 %v323
  %387 = vmatpush1.bf16.msra.mxu0 %v322
  %388 = vmatprep.subr.bf16.mxu0 %v325
  %389 = vmatpush1.bf16.msra.mxu0 %v324
  %390 = vmatprep.subr.bf16.mxu0 %v327
  %391 = vmatpush1.bf16.msra.mxu0 %v326
  %392 = vmatprep.subr.bf16.mxu0 %v329
  %393 = vmatpush1.bf16.msra.mxu0 %v328
  %394 = vmatprep.subr.bf16.mxu0 %v331
  %395 = vmatpush1.bf16.msra.mxu0 %v330
  %396 = vmatprep.subr.bf16.mxu0 %v333
  %397 = vmatpush1.bf16.msra.mxu0 %v332
  %398 = vmatprep.subr.bf16.mxu0 %v335
  %399 = vmatpush1.bf16.msra.mxu0 %v334
  %400 = vmatprep.subr.bf16.mxu0 %v337
  %401 = vmatpush1.bf16.msra.mxu0 %v336
  %402 = vmatprep.mubr.bf16.mxu0 %v159
  %403 = vmatmul.mubr.bf16.gmra.mrb[0].mxu0 %v158
  %v404 = vpop.f32.mrb[0].mxu0
  %v405 = vadd.f32 %v76, %v404
  %v406 = vpop.f32.mrb[0].mxu0
  %v407 = vadd.f32 %v80, %v406
  %v408 = vpop.f32.mrb[0].mxu0
  %v409 = vadd.f32 %v76, %v408
  %v410 = vpop.f32.mrb[0].mxu0
  %v411 = vadd.f32 %v80, %v410
  %412 = vmatprep.mubr.bf16.mxu0 %v161
  %413 = vmatmul.mubr.bf16.gmra.mrb[0].mxu0 %v160
  %v414 = vpop.f32.mrb[0].mxu0
  %v415 = vadd.f32 %v76, %v414
  %v416 = vpop.f32.mrb[0].mxu0
  %v417 = vadd.f32 %v80, %v416
  %v418 = vpop.f32.mrb[0].mxu0
  %v419 = vadd.f32 %v76, %v418
  %v420 = vpop.f32.mrb[0].mxu0
  %v421 = vadd.f32 %v80, %v420
  %422 = vmatprep.mubr.bf16.mxu0 %v163
  %423 = vmatmul.mubr.bf16.gmra.mrb[0].mxu0 %v162
  %v424 = vpop.f32.mrb[0].mxu0
  %v425 = vadd.f32 %v76, %v424
  %v426 = vpop.f32.mrb[0].mxu0
  %v427 = vadd.f32 %v80, %v426
  %v428 = vpop.f32.mrb[0].mxu0
  %v429 = vadd.f32 %v76, %v428
  %v430 = vpop.f32.mrb[0].mxu0
  %v431 = vadd.f32 %v80, %v430
  %432 = vmatprep.mubr.bf16.mxu0 %v165
  %433 = vmatmul.mubr.bf16.gmra.mrb[0].mxu0 %v164
  %v434 = vpop.f32.mrb[0].mxu0
  %v435 = vadd.f32 %v76, %v434
  %v436 = vpop.f32.mrb[0].mxu0
  %v437 = vadd.f32 %v80, %v436
  %v438 = vpop.f32.mrb[0].mxu0
  %v439 = vadd.f32 %v76, %v438
  %v440 = vpop.f32.mrb[0].mxu0
  %v441 = vadd.f32 %v80, %v440
  %442 = vmatprep.mubr.bf16.mxu0 %v167
  %443 = vmatmul.mubr.bf16.gmra.mrb[0].mxu0 %v166
  %v444 = vpop.f32.mrb[0].mxu0
  %v445 = vadd.f32 %v76, %v444
  %v446 = vpop.f32.mrb[0].mxu0
  %v447 = vadd.f32 %v80, %v446
  %v448 = vpop.f32.mrb[0].mxu0
  %v449 = vadd.f32 %v76, %v448
  %v450 = vpop.f32.mrb[0].mxu0
  %v451 = vadd.f32 %v80, %v450
  %452 = vmatprep.mubr.bf16.mxu0 %v169
  %453 = vmatmul.mubr.bf16.gmra.mrb[0].mxu0 %v168
  %v454 = vpop.f32.mrb[0].mxu0
  %v455 = vadd.f32 %v76, %v454
  %v456 = vpop.f32.mrb[0].mxu0
  %v457 = vadd.f32 %v80, %v456
  %v458 = vpop.f32.mrb[0].mxu0
  %v459 = vadd.f32 %v76, %v458
  %v460 = vpop.f32.mrb[0].mxu0
  %v461 = vadd.f32 %v80, %v460
  %462 = vmatprep.mubr.bf16.mxu0 %v171
  %463 = vmatmul.mubr.bf16.gmra.mrb[0].mxu0 %v170
  %v464 = vpop.f32.mrb[0].mxu0
  %v465 = vadd.f32 %v76, %v464
  %v466 = vpop.f32.mrb[0].mxu0
  %v467 = vadd.f32 %v80, %v466
  %v468 = vpop.f32.mrb[0].mxu0
  %v469 = vadd.f32 %v76, %v468
  %v470 = vpop.f32.mrb[0].mxu0
  %v471 = vadd.f32 %v80, %v470
  %472 = vmatprep.mubr.bf16.mxu0 %v173
  %473 = vmatmul.mubr.bf16.gmra.mrb[0].mxu0 %v172
  %v474 = vpop.f32.mrb[0].mxu0
  %v475 = vadd.f32 %v76, %v474
  %v476 = vpop.f32.mrb[0].mxu0
  %v477 = vadd.f32 %v80, %v476
  %v478 = vpop.f32.mrb[0].mxu0
  %v479 = vadd.f32 %v76, %v478
  %v480 = vpop.f32.mrb[0].mxu0
  %v481 = vadd.f32 %v80, %v480
  %482 = vmatprep.mubr.bf16.mxu0 %v175
  %483 = vmatmul.mubr.bf16.gmra.mrb[0].mxu0 %v174
  %v484 = vpop.f32.mrb[0].mxu0
  %v485 = vadd.f32 %v76, %v484
  %v486 = vpop.f32.mrb[0].mxu0
  %v487 = vadd.f32 %v80, %v486
  %v488 = vpop.f32.mrb[0].mxu0
  %v489 = vadd.f32 %v76, %v488
  %v490 = vpop.f32.mrb[0].mxu0
  %v491 = vadd.f32 %v80, %v490
  %492 = vmatprep.mubr.bf16.mxu0 %v177
  %493 = vmatmul.mubr.bf16.gmra.mrb[0].mxu0 %v176
  %v494 = vpop.f32.mrb[0].mxu0
  %v495 = vadd.f32 %v76, %v494
  %v496 = vpop.f32.mrb[0].mxu0
  %v497 = vadd.f32 %v80, %v496
  %v498 = vpop.f32.mrb[0].mxu0
  %v499 = vadd.f32 %v76, %v498
  %v500 = vpop.f32.mrb[0].mxu0
  %v501 = vadd.f32 %v80, %v500
  %502 = vmatprep.mubr.bf16.mxu0 %v179
  %503 = vmatmul.mubr.bf16.gmra.mrb[0].mxu0 %v178
  %v504 = vpop.f32.mrb[0].mxu0
  %v505 = vadd.f32 %v76, %v504
  %v506 = vpop.f32.mrb[0].mxu0
  %v507 = vadd.f32 %v80, %v506
  %v508 = vpop.f32.mrb[0].mxu0
  %v509 = vadd.f32 %v76, %v508
  %v510 = vpop.f32.mrb[0].mxu0
  %v511 = vadd.f32 %v80, %v510
  %512 = vmatprep.mubr.bf16.mxu0 %v181
  %513 = vmatmul.mubr.bf16.gmra.mrb[0].mxu0 %v180
  %v514 = vpop.f32.mrb[0].mxu0
  %v515 = vadd.f32 %v76, %v514
  %v516 = vpop.f32.mrb[0].mxu0
  %v517 = vadd.f32 %v80, %v516
  %v518 = vpop.f32.mrb[0].mxu0
  %v519 = vadd.f32 %v76, %v518
  %v520 = vpop.f32.mrb[0].mxu0
  %v521 = vadd.f32 %v80, %v520
  %522 = vmatprep.mubr.bf16.mxu0 %v183
  %523 = vmatmul.mubr.bf16.gmra.mrb[0].mxu0 %v182
  %v524 = vpop.f32.mrb[0].mxu0
  %v525 = vadd.f32 %v76, %v524
  %v526 = vpop.f32.mrb[0].mxu0
  %v527 = vadd.f32 %v80, %v526
  %v528 = vpop.f32.mrb[0].mxu0
  %v529 = vpop.f32.mrb[0].mxu0
  %530 = vdwg.mxu0
  %531 = vst [vmem:[%s3] sm:$0xff] %v405
  %532 = vst [vmem:[%s3 + $0x8] sm:$0xff] %v407
  %533 = vst [vmem:[%s3 + $0x10] sm:$0xff] %v409
  %534 = vst [vmem:[%s3 + $0x18] sm:$0xff] %v411
  %535 = vst [vmem:[%s3 + $0x20] sm:$0xff] %v415
  %536 = vst [vmem:[%s3 + $0x28] sm:$0xff] %v417
  %537 = vst [vmem:[%s3 + $0x30] sm:$0xff] %v419
  %538 = vst [vmem:[%s3 + $0x38] sm:$0xff] %v421
  %539 = vst [vmem:[%s3 + $0x40] sm:$0xff] %v425
  %540 = vst [vmem:[%s3 + $0x48] sm:$0xff] %v427
  %541 = vst [vmem:[%s3 + $0x50] sm:$0xff] %v429
  %542 = vst [vmem:[%s3 + $0x58] sm:$0xff] %v431
  %543 = vst [vmem:[%s3 + $0x60] sm:$0xff] %v435
  %544 = vst [vmem:[%s3 + $0x68] sm:$0xff] %v437
  %545 = vst [vmem:[%s3 + $0x70] sm:$0xff] %v439
  %546 = vst [vmem:[%s3 + $0x78] sm:$0xff] %v441
  %547 = vst [vmem:[%s3 + $0x80] sm:$0xff] %v445
  %548 = vst [vmem:[%s3 + $0x88] sm:$0xff] %v447
  %549 = vst [vmem:[%s3 + $0x90] sm:$0xff] %v449
  %550 = vst [vmem:[%s3 + $0x98] sm:$0xff] %v451
  %551 = vst [vmem:[%s3 + $0xa0] sm:$0xff] %v455
  %552 = vst [vmem:[%s3 + $0xa8] sm:$0xff] %v457
  %553 = vst [vmem:[%s3 + $0xb0] sm:$0xff] %v459
  %554 = vst [vmem:[%s3 + $0xb8] sm:$0xff] %v461
  %555 = vst [vmem:[%s3 + $0xc0] sm:$0xff] %v465
  %556 = vst [vmem:[%s3 + $0xc8] sm:$0xff] %v467
  %557 = vst [vmem:[%s3 + $0xd0] sm:$0xff] %v469
  %558 = vst [vmem:[%s3 + $0xd8] sm:$0xff] %v471
  %559 = vst [vmem:[%s3 + $0xe0] sm:$0xff] %v475
  %560 = vst [vmem:[%s3 + $0xe8] sm:$0xff] %v477
  %561 = vst [vmem:[%s3 + $0xf0] sm:$0xff] %v479
  %562 = vst [vmem:[%s3 + $0xf8] sm:$0xff] %v481
  %563 = vst [vmem:[%s3 + $0x100] sm:$0xff] %v485
  %564 = vst [vmem:[%s3 + $0x108] sm:$0xff] %v487
  %565 = vst [vmem:[%s3 + $0x110] sm:$0xff] %v489
  %566 = vst [vmem:[%s3 + $0x118] sm:$0xff] %v491
  %567 = vst [vmem:[%s3 + $0x120] sm:$0xff] %v495
  %568 = vst [vmem:[%s3 + $0x128] sm:$0xff] %v497
  %569 = vst [vmem:[%s3 + $0x130] sm:$0xff] %v499
  %570 = vst [vmem:[%s3 + $0x138] sm:$0xff] %v501
  %571 = vst [vmem:[%s3 + $0x140] sm:$0xff] %v505
  %572 = vst [vmem:[%s3 + $0x148] sm:$0xff] %v507
  %573 = vst [vmem:[%s3 + $0x150] sm:$0xff] %v509
  %574 = vst [vmem:[%s3 + $0x158] sm:$0xff] %v511
  %575 = vst [vmem:[%s3 + $0x160] sm:$0xff] %v515
  %576 = vst [vmem:[%s3 + $0x168] sm:$0xff] %v517
  %577 = vst [vmem:[%s3 + $0x170] sm:$0xff] %v519
  %578 = vst [vmem:[%s3 + $0x178] sm:$0xff] %v521
  %579 = vst [vmem:[%s3 + $0x180] sm:$0xff] %v525
  %580 = vst [vmem:[%s3 + $0x188] sm:$0xff] %v527
  // Predicated region
  $region14: #{_lambda_.1} parent=0 // pred_check
    _
  $region15: #{_lambda_.1} parent=0 // pred_check_branch
    %582 = sbr.rel (0) target = $region17
  $region16: #{_lambda_.1} parent=0 // pred_region
    _
  $region17: #{_lambda_.1} parent=0 // pred_fallthru
    _
  // Predicated region
  $region18: #{_lambda_.1} parent=0 // pred_check
    _
  $region19: #{_lambda_.1} parent=0 // pred_check_branch
    %584 = sbr.rel (0) target = $region21
  $region20: #{_lambda_.1} parent=0 // pred_region
    _
  $region21: #{_lambda_.1} parent=0 // pred_fallthru
    _

</llo_original>
